<compile_context>
chip_gen: v7x
topology: tpu7x:2x2x1
jax: 0.10.0
libtpu: 0.0.40
codegen_flags: <defaults>
</compile_context>

<pallas_src>
import functools

import jax
import jax.numpy as jnp
from jax.experimental import pallas as pl
from jax.experimental.pallas import tpu as pltpu


def _round_up(x, m):
    return ((x + m - 1) // m) * m


def _cdiv(a, b):
    return (a + b - 1) // b


def _vmem_capacity_bytes():
    try:
        return int(pltpu.get_tpu_info().vmem_capacity_bytes)
    except Exception:
        pass
    try:
        kind = jax.devices()[0].device_kind.lower()
        if "v7" in kind:
            return 64 << 20
        return 128 << 20
    except Exception:
        return 64 << 20


def _default_exp_in_bf16():
    # bf16 EUP exists on v6e/v7x; keep f32 exp on older generations.
    try:
        kind = jax.devices()[0].device_kind.lower()
        return ("v6" in kind) or ("v7" in kind)
    except Exception:
        return False


# ---------------------------------------------------------------------------
# Decoder.norm : LayerNorm with torch semantics (unbiased std, eps added to std)
# ---------------------------------------------------------------------------
def _layernorm_kernel(x_ref, g_ref, b_ref, o_ref, *, eps, n_feat):
    x = x_ref[...].astype(jnp.float32)
    mean = jnp.mean(x, axis=-1, keepdims=True)
    c = x - mean
    var = jnp.sum(c * c, axis=-1, keepdims=True) / max(n_feat - 1, 1)  # unbiased
    std = jnp.sqrt(var)
    y = g_ref[...] * (c / (std + eps)) + b_ref[...]
    o_ref[...] = y.astype(o_ref.dtype)


def decoder_norm_forward(x, gamma, beta, *, eps=1e-6, block_rows=256):
    """Decoder's final LayerNorm: a_2 * (x - mean) / (std + eps) + b_2."""
    lead = x.shape[:-1]
    d = x.shape[-1]
    x2 = x.reshape(-1, d)
    n = x2.shape[0]

    n_tiles = max(1, _cdiv(n, block_rows))
    tr = max(8, _round_up(_cdiv(n, n_tiles), 8))
    rows_p = _round_up(n, tr)
    if rows_p != n:
        x2 = jnp.pad(x2, ((0, rows_p - n), (0, 0)))

    g = jnp.asarray(gamma, jnp.float32).reshape(1, d)
    b = jnp.asarray(beta, jnp.float32).reshape(1, d)

    out = pl.pallas_call(
        functools.partial(_layernorm_kernel, eps=float(eps), n_feat=d),
        out_shape=jax.ShapeDtypeStruct((rows_p, d), x.dtype),
        grid_spec=pltpu.PrefetchScalarGridSpec(
            num_scalar_prefetch=0,
            grid=(rows_p // tr,),
            in_specs=[
                pl.BlockSpec((tr, d), lambda i: (i, 0)),
                pl.BlockSpec((1, d), lambda i: (0, 0)),
                pl.BlockSpec((1, d), lambda i: (0, 0)),
            ],
            out_specs=pl.BlockSpec((tr, d), lambda i: (i, 0)),
        ),
        compiler_params=pltpu.CompilerParams(dimension_semantics=("parallel",)),
    )(x2, g, b)
    return out[:n].reshape(*lead, d)


# ---------------------------------------------------------------------------
# Generator head: log_softmax(x @ W^T + b) with online logsumexp + logits stash
# ---------------------------------------------------------------------------
def _make_generator_kernel(exp_in_bf16):
    def kernel(x_ref, w_ref, b_ref, out_ref, logits_ref, m_ref, l_ref):
        # grid = (row_tiles, 2, vocab_tiles); p=0 stats pass, p=1 emit pass.
        p = pl.program_id(1)
        v = pl.program_id(2)

        @pl.when((p == 0) & (v == 0))
        def _init():
            m_ref[...] = jnp.full_like(m_ref, -jnp.inf)
            l_ref[...] = jnp.zeros_like(l_ref)

        @pl.when(p == 0)
        def _stats():
            # Single matmul per (row-tile, vocab-tile): bf16 operands on the
            # MXU, f32 accumulation; the logits tile is stashed in VMEM so the
            # emit pass never recomputes it (no duplicate weight stream).
            logits = jnp.dot(x_ref[...], w_ref[...],
                             preferred_element_type=jnp.float32) + b_ref[...]
            logits_ref[v] = logits.astype(logits_ref.dtype)

            m_prev = m_ref[...]
            m_new = jnp.maximum(m_prev, jnp.max(logits, axis=-1, keepdims=True))
            z = logits - m_new
            if exp_in_bf16:
                e = jnp.exp(z.astype(jnp.bfloat16)).astype(jnp.float32)
            else:
                e = jnp.exp(z)
            l_ref[...] = (l_ref[...] * jnp.exp(m_prev - m_new)
                          + jnp.sum(e, axis=-1, keepdims=True))
            m_ref[...] = m_new

        @pl.when(p == 1)
        def _emit():
            lse = m_ref[...] + jnp.log(l_ref[...])
            logits = logits_ref[v].astype(jnp.float32)
            out_ref[...] = (logits - lse).astype(out_ref.dtype)

    return kernel


def prepare_generator_params(w, b, *, tn=1024):
    """One-time prep of nn.Linear(d_model, vocab) params: transpose, bf16 cast,
    pad vocab to a tile multiple.  Hoists a full D x V HBM cast/pad pass out of
    every forward call."""
    vocab, d_model = w.shape
    assert b.shape == (vocab,)
    tn = max(128, min(_round_up(tn, 128), _round_up(vocab, 128)))
    vocab_p = _round_up(vocab, tn)

    w_t = jnp.asarray(w).T.astype(jnp.bfloat16)          # (d_model, vocab)
    b2 = jnp.asarray(b).astype(jnp.float32)
    if vocab_p != vocab:
        w_t = jnp.pad(w_t, ((0, 0), (0, vocab_p - vocab)))
        # Padded columns get a hugely negative bias -> exp() underflows to 0.
        # Padding is always < tn, so a fully-padded vocab tile cannot occur.
        b2 = jnp.pad(b2, (0, vocab_p - vocab), constant_values=-1e30)
    return {
        "w_t": w_t,
        "b": b2.reshape(1, vocab_p),
        "d_model": d_model,
        "vocab": vocab,
        "vocab_p": vocab_p,
        "tn": tn,
    }


def generator_forward(params, x, *, tm_max=512, out_dtype=jnp.float32,
                      exp_in_bf16=None):
    """log_softmax(x @ W^T + b, axis=-1) using pre-prepared params."""
    d_model = params["d_model"]
    vocab = params["vocab"]
    vocab_p = params["vocab_p"]
    tn = params["tn"]
    w_t = params["w_t"]
    b2 = params["b"]

    lead = x.shape[:-1]
    assert x.shape[-1] == d_model
    x2 = x.reshape(-1, d_model).astype(jnp.bfloat16)
    n_rows = x2.shape[0]

    if exp_in_bf16 is None:
        exp_in_bf16 = _default_exp_in_bf16()

    out_bytes = jnp.dtype(out_dtype).itemsize
    n_vocab_tiles = vocab_p // tn

    capacity = _vmem_capacity_bytes()
    budget = (capacity * 3) // 4          # ~48 MiB on v7x, ~96 MiB on v5e/v6e

    def est(tm_, stash_bytes):
        return (2 * tm_ * d_model * 2          # x tile (bf16, double-buffered)
                + 2 * d_model * tn * 2         # w tile (bf16, double-buffered)
                + 2 * tn * 4                   # bias tile
                + 2 * tm_ * tn * out_bytes     # out tile (double-buffered)
                + tm_ * vocab_p * stash_bytes  # logits stash (scratch, single)
                + 2 * 2 * tm_ * 128 * 4)       # m/l scratch (lane padded)

    # Pick stash dtype + row tile under the VMEM budget; f32 stash where it
    # fits (v5e/v6e), bf16 stash / smaller tm on 64 MiB parts (v7x).
    tm_cap = max(16, min(_round_up(tm_max, 16), _round_up(n_rows, 16)))
    stash_dtype, stash_bytes = jnp.float32, 4
    if est(tm_cap, 4) > budget:
        stash_dtype, stash_bytes = jnp.bfloat16, 2
    while est(tm_cap, stash_bytes) > budget and tm_cap > 16:
        tm_cap = max(16, _round_up(tm_cap // 2, 16))

    # Balanced row tiles: minimize padding on the last tile.
    n_row_tiles = _cdiv(n_rows, tm_cap)
    tm = max(16, _round_up(_cdiv(n_rows, n_row_tiles), 16))
    rows_p = _round_up(n_rows, tm)
    n_row_tiles = rows_p // tm
    # TODO(synk): for single-row-tile (decode) shapes on v7x, a vocab-split
    # across the two TensorCores with a small cross-core combine would keep
    # both MXUs busy; not implemented here.

    if rows_p != n_rows:
        x2 = jnp.pad(x2, ((0, rows_p - n_rows), (0, 0)))

    vmem_limit = int(min(capacity - (8 << 20),
                         max(budget, est(tm, stash_bytes) + (4 << 20), 16 << 20)))

    nv = n_vocab_tiles

    def _w_map(i, p, v):
        # Stats pass streams weight tile v; emit pass stays pinned on the last
        # weight block so no weight tile is re-DMA'd from HBM.
        return (0, v * (1 - p) + (nv - 1) * p)

    # Output stays on block (i, 0) during the whole stats pass (never flushed,
    # since its block index does not change) and each block (i, v) is written
    # exactly once in the emit pass; even a spurious early flush of (i, 0)
    # would be overwritten by the emit-pass write before the final flush.
    out = pl.pallas_call(
        _make_generator_kernel(bool(exp_in_bf16)),
        out_shape=jax.ShapeDtypeStruct((rows_p, vocab_p), out_dtype),
        grid_spec=pltpu.PrefetchScalarGridSpec(
            num_scalar_prefetch=0,
            grid=(n_row_tiles, 2, n_vocab_tiles),
            in_specs=[
                pl.BlockSpec((tm, d_model), lambda i, p, v: (i, 0)),
                pl.BlockSpec((d_model, tn), _w_map),
                pl.BlockSpec((1, tn), _w_map),
            ],
            out_specs=pl.BlockSpec((tm, tn), lambda i, p, v: (i, p * v)),
            scratch_shapes=[
                pltpu.VMEM((n_vocab_tiles, tm, tn), stash_dtype),  # logits stash
                pltpu.VMEM((tm, 1), jnp.float32),                  # running max
                pltpu.VMEM((tm, 1), jnp.float32),                  # running sum-exp
            ],
        ),
        compiler_params=pltpu.CompilerParams(
            dimension_semantics=("parallel", "arbitrary", "arbitrary"),
            vmem_limit_bytes=vmem_limit,
        ),
    )(x2, w_t, b2)

    out = out[:n_rows, :vocab]
    return out.reshape(*lead, vocab)


if __name__ == "__main__":
    batch, seq, d_model, vocab = 2, 8, 32, 128
    eps = 1e-6

    key = jax.random.PRNGKey(0)
    kx, kg, kb2, kw, kb = jax.random.split(key, 5)

    x = jax.random.normal(kx, (batch, seq, d_model), dtype=jnp.float32)

    # Decoder.norm parameters (slightly perturbed from ones/zeros init).
    gamma = 1.0 + 0.1 * jax.random.normal(kg, (d_model,), dtype=jnp.float32)
    beta = 0.1 * jax.random.normal(kb2, (d_model,), dtype=jnp.float32)

    # Generator head: nn.Linear(d_model, vocab) weight (vocab, d_model), bias.
    w = jax.random.normal(kw, (vocab, d_model), dtype=jnp.float32) / d_model ** 0.5
    b = 0.01 * jax.random.normal(kb, (vocab,), dtype=jnp.float32)

    gen_params = prepare_generator_params(w, b)   # one-time bf16 cast + pad

    h = decoder_norm_forward(x, gamma, beta, eps=eps)
    y = generator_forward(gen_params, h)
    h, y = jax.block_until_ready((h, y))

    # LayerNorm reference (torch semantics: unbiased std, eps added to std).
    mean = jnp.mean(x, axis=-1, keepdims=True)
    std = jnp.std(x, axis=-1, keepdims=True, ddof=1)
    h_ref = gamma * (x - mean) / (std + eps) + beta

    # Generator reference with the same bf16 MXU operands / f32 accumulation,
    # fed from the kernel's LayerNorm output so only the head is being checked.
    logits_ref = jnp.dot(h.astype(jnp.bfloat16), w.T.astype(jnp.bfloat16),
                         preferred_element_type=jnp.float32) + b
    y_ref = jax.nn.log_softmax(logits_ref, axis=-1)

    assert h.shape == x.shape
    assert y.shape == (batch, seq, vocab)
    assert jnp.allclose(h, h_ref, atol=1e-4, rtol=1e-4), "layernorm mismatch"
    assert jnp.allclose(y, y_ref, atol=1e-2, rtol=1e-2), "log_softmax mismatch"

    print("KERNEL_OK")
</pallas_src>

<mosaic_0001>
module attributes {stable_mosaic.version = 11 : i64} {
  func.func @_layernorm_kernel(%arg0: i32, %arg1: memref<16x32xf32, #tpu.memory_space<vmem>>, %arg2: memref<1x32xf32, #tpu.memory_space<vmem>>, %arg3: memref<1x32xf32, #tpu.memory_space<vmem>>, %arg4: memref<16x32xf32, #tpu.memory_space<vmem>>) attributes {dimension_semantics = [#tpu.dimension_semantics<parallel>], iteration_bounds = array<i64: 1>, scalar_prefetch = 0 : i64, scratch_operands = 0 : i64, tpu.core_type = #tpu.core_type<tc>, window_params = [{transform_indices = @transform_0, window_bounds = array<i64: 16, 32>}, {pipeline_mode = #tpu.pipeline_mode<synchronous>, transform_indices = @transform_1, window_bounds = array<i64: 1, 32>}, {pipeline_mode = #tpu.pipeline_mode<synchronous>, transform_indices = @transform_2, window_bounds = array<i64: 1, 32>}, {transform_indices = @transform_3, window_bounds = array<i64: 16, 32>}]} {
    %c0 = arith.constant 0 : index
    %c0_0 = arith.constant 0 : index
    %0 = vector.load %arg1[%c0, %c0_0] : memref<16x32xf32, #tpu.memory_space<vmem>>, vector<16x32xf32>
    %cst = arith.constant dense<0.000000e+00> : vector<16xf32>
    %1 = vector.multi_reduction <add>, %0, %cst [1] : vector<16x32xf32> to vector<16xf32>
    %2 = vector.shape_cast %1 : vector<16xf32> to vector<16x1xf32>
    %cst_1 = arith.constant 3.200000e+01 : f32
    %3 = vector.broadcast %cst_1 : f32 to vector<16x1xf32>
    %4 = arith.divf %2, %3 : vector<16x1xf32>
    %5 = vector.broadcast %4 : vector<16x1xf32> to vector<16x32xf32>
    %6 = arith.subf %0, %5 : vector<16x32xf32>
    %7 = arith.mulf %6, %6 : vector<16x32xf32>
    %cst_2 = arith.constant dense<0.000000e+00> : vector<16xf32>
    %8 = vector.multi_reduction <add>, %7, %cst_2 [1] : vector<16x32xf32> to vector<16xf32>
    %9 = vector.shape_cast %8 : vector<16xf32> to vector<16x1xf32>
    %cst_3 = arith.constant 3.100000e+01 : f32
    %10 = vector.broadcast %cst_3 : f32 to vector<16x1xf32>
    %11 = arith.divf %9, %10 : vector<16x1xf32>
    %12 = math.sqrt %11 : vector<16x1xf32>
    %c0_4 = arith.constant 0 : index
    %c0_5 = arith.constant 0 : index
    %13 = vector.load %arg2[%c0_4, %c0_5] : memref<1x32xf32, #tpu.memory_space<vmem>>, vector<1x32xf32>
    %cst_6 = arith.constant 9.99999997E-7 : f32
    %14 = vector.broadcast %cst_6 : f32 to vector<16x1xf32>
    %15 = arith.addf %12, %14 : vector<16x1xf32>
    %16 = vector.broadcast %15 : vector<16x1xf32> to vector<16x32xf32>
    %17 = arith.divf %6, %16 : vector<16x32xf32>
    %18 = vector.broadcast %13 : vector<1x32xf32> to vector<16x32xf32>
    %19 = arith.mulf %18, %17 : vector<16x32xf32>
    %c0_7 = arith.constant 0 : index
    %c0_8 = arith.constant 0 : index
    %20 = vector.load %arg3[%c0_7, %c0_8] : memref<1x32xf32, #tpu.memory_space<vmem>>, vector<1x32xf32>
    %21 = vector.broadcast %20 : vector<1x32xf32> to vector<16x32xf32>
    %22 = arith.addf %19, %21 : vector<16x32xf32>
    %c0_9 = arith.constant 0 : index
    %c0_10 = arith.constant 0 : index
    %23 = vector.load %arg4[%c0_9, %c0_10] : memref<16x32xf32, #tpu.memory_space<vmem>>, vector<16x32xf32>
    tpu.vector_store %arg4[%c0_9, %c0_10], %22 {strides = array<i32>} : memref<16x32xf32, #tpu.memory_space<vmem>>, vector<16x32xf32>,
    return
  }
  func.func @transform_0(%arg0: i32) -> (i32, i32) {
    %c0_i32 = arith.constant 0 : i32
    %c0_i32_0 = arith.constant 0 : i32
    return %arg0, %c0_i32 : i32, i32
  }
  func.func @transform_1(%arg0: i32) -> (i32, i32) {
    %c0_i32 = arith.constant 0 : i32
    %c0_i32_0 = arith.constant 0 : i32
    %c0_i32_1 = arith.constant 0 : i32
    return %c0_i32, %c0_i32_0 : i32, i32
  }
  func.func @transform_2(%arg0: i32) -> (i32, i32) {
    %c0_i32 = arith.constant 0 : i32
    %c0_i32_0 = arith.constant 0 : i32
    %c0_i32_1 = arith.constant 0 : i32
    return %c0_i32, %c0_i32_0 : i32, i32
  }
  func.func @transform_3(%arg0: i32) -> (i32, i32) {
    %c0_i32 = arith.constant 0 : i32
    %c0_i32_0 = arith.constant 0 : i32
    return %arg0, %c0_i32 : i32, i32
  }
}

</mosaic_0001>

<llo_original>
// kernel: tpu_custom_call.1
$region0: #{tpu_custom_call.1}
  #allocation0 [shape = 'u32[]', space=smem, size = 0x4, offset = 0x4, fixed_abs, tag = 'smem constant byte address 0x4 - core index']
  #allocation1 [shape = 'u32[144,128]{1,0:T(1,128)}', space=vmem, size = 0x12000, scoped, tag = 'internal scratch']
  %s0 = inlined_call_operand.hbm [shape: f32[16,32], index: 0, kind: input, shape index: {}]
  %s1 = inlined_call_operand.vmem [shape: f32[1,32], index: 1, kind: input, shape index: {}]
  %s2 = inlined_call_operand.vmem [shape: f32[1,32], index: 2, kind: input, shape index: {}]
  %s3 = inlined_call_operand.hbm [shape: f32[16,32], index: 3, kind: output, shape index: {}]
  %s4 = sld [smem:[#allocation0]]
  $region26: #{tpu_custom_call.1} parent=0
    _
  %s6 = ssub.s32 1, %s4
  %s7 = scalar_select 0, %s6, %s4
  $region1: #{tpu_custom_call.1} parent=0
    #allocation2 [shape = 'u8[8192]{0}', space=vmem, size = 0x2000, scoped, tag = 'input window, operand 0, single buffered']
    #allocation3 [shape = 's32[1]{0}', space=sflag, size = 0x4, scoped, tag = 'scoped memory for tpu_custom_call.1']
    #allocation4 [shape = 's32[1]{0}', space=sflag, size = 0x4, scoped, tag = 'scoped memory for tpu_custom_call.1']
    #allocation5 [shape = 'u8[8192]{0}', space=vmem, size = 0x2000, scoped, tag = 'output window, operand 0, single buffered']
    %8 = vsyncpa [#allocation3], 0
    %9 = vsyncpa [#allocation4], 0
    // Predicated region
    $region2: #{tpu_custom_call.1} parent=1 // pred_check
      _
    $region3: #{tpu_custom_call.1} parent=1 // pred_check_branch
      %11 = sbr.rel (0) target = $region5
    $region4: #{tpu_custom_call.1} parent=1 // pred_region
      %s13 = ssub.s32 256, 256
      %14 = vsyncadd [#allocation3], %s13
      %s15 = sshll.u32 [#allocation2], 4
      %s16 = int_to_ptr.vmem [resolvable:$true] %s15
      %21 = dma.hbm_to_vmem [thread:$0]  %s0, 256, %s16, [#allocation3], 128, 128, 8
    $region5: #{tpu_custom_call.1} parent=1 // pred_fallthru
      _
    // Predicated region
    $region6: #{tpu_custom_call.1} parent=1 // pred_check
      _
    $region7: #{tpu_custom_call.1} parent=1 // pred_check_branch
      %23 = sbr.rel (0) target = $region9
    $region8: #{tpu_custom_call.1} parent=1 // pred_region
      _
    $region9: #{tpu_custom_call.1} parent=1 // pred_fallthru
      _
    // Predicated region
    $region10: #{tpu_custom_call.1} parent=1 // pred_check
      _
    $region11: #{tpu_custom_call.1} parent=1 // pred_check_branch
      %25 = sbr.rel (0) target = $region13
    $region12: #{tpu_custom_call.1} parent=1 // pred_region
      _
    $region13: #{tpu_custom_call.1} parent=1 // pred_fallthru
      _
    // Predicated region
    $region14: #{tpu_custom_call.1} parent=1 // pred_check
      _
    $region15: #{tpu_custom_call.1} parent=1 // pred_check_branch
      %27 = sbr.rel (0) target = $region17
    $region16: #{tpu_custom_call.1} parent=1 // pred_region
      %28 = dma.done [#allocation3], 256
    $region17: #{tpu_custom_call.1} parent=1 // pred_fallthru
      _
    %v29 = vld [vmem:[#allocation2] sm:$0xff]
    %v30 = vld [vmem:[#allocation2 + $0x8] sm:$0xff]
    %vm31 = vcmask 261120
    %v32 = vsel %vm31, %v29, 0.0
    %33 = vadd.xlane.f32.xlu0 %v32
    %v34 = vpop.xlane.xlu0 %33
    %v35 = vsel %vm31, %v30, 0.0
    %36 = vadd.xlane.f32.xlu0 %v35
    %v37 = vpop.xlane.xlu0 %36
    %v38 = vrcp.pop 32.0
    %v39 = vmul.f32 %v34, %v38
    %v40 = vmul.f32 %v37, %v38
    %v41 = vsub.f32 %v29, %v39
    %v42 = vsub.f32 %v30, %v40
    %v43 = vmul.f32 %v41, %v41
    %v44 = vmul.f32 %v42, %v42
    %v45 = vsel %vm31, %v43, 0.0
    %46 = vadd.xlane.f32.xlu0 %v45
    %v47 = vpop.xlane.xlu0 %46
    %v48 = vsel %vm31, %v44, 0.0
    %49 = vadd.xlane.f32.xlu0 %v48
    %v50 = vpop.xlane.xlu0 %49
    %v51 = vrcp.pop 31.0
    %v52 = vmul.f32 %v47, %v51
    %v53 = vmul.f32 %v50, %v51
    %v54 = vrsqrt.pop %v52
    %v55 = vmul.f32 %v52, %v54
    %vm56 = vcmp.eq.f32.partialorder %v52, inf
    %v57 = vsel %vm56, %v52, %v55
    %vm58 = vcmp.eq.f32.partialorder %v52, 0.0
    %v59 = vand.u32 %v52, 2147483648
    %v60 = vsel %vm58, %v59, %v57
    %v61 = vrsqrt.pop %v53
    %v62 = vmul.f32 %v53, %v61
    %vm63 = vcmp.eq.f32.partialorder %v53, inf
    %v64 = vsel %vm63, %v53, %v62
    %vm65 = vcmp.eq.f32.partialorder %v53, 0.0
    %v66 = vand.u32 %v53, 2147483648
    %v67 = vsel %vm65, %v66, %v64
    %v68 = vld [vmem:[%s1] sm:$0x1]
    %v69 = vadd.f32 %v60, 1e-06
    %v70 = vadd.f32 %v67, 1e-06
    %v71 = vrcp.pop %v69
    %v72 = vmul.f32 %v41, %v71
    %v73 = vrcp.pop %v70
    %v74 = vmul.f32 %v42, %v73
    %v76 = vlaneseq
    %v77 = vshrl.u32 %v76, 7
    %v78 = vsub.s32 0, %v77
    %v79 = vrot.slane %v68, %v78
    %v81 = vmul.f32 %v79, %v72
    %v82 = vmul.f32 %v79, %v74
    %v83 = vld [vmem:[%s2] sm:$0x1]
    %v85 = vlaneseq
    %v86 = vshrl.u32 %v85, 7
    %v87 = vsub.s32 0, %v86
    %v88 = vrot.slane %v83, %v87
    %v90 = vadd.f32 %v81, %v88
    %v91 = vadd.f32 %v82, %v88
    %92 = vst.msk [vmem:[#allocation5] sm:$0xff] %vm31, %v90
    %93 = vst.msk [vmem:[#allocation5 + $0x8] sm:$0xff] %vm31, %v91
    // Predicated region
    $region18: #{tpu_custom_call.1} parent=1 // pred_check
      _
    $region19: #{tpu_custom_call.1} parent=1 // pred_check_branch
      %95 = sbr.rel (0) target = $region21
    $region20: #{tpu_custom_call.1} parent=1 // pred_region
      %s97 = ssub.s32 256, 256
      %98 = vsyncadd [#allocation4], %s97
      %s99 = sshll.u32 [#allocation5], 4
      %s100 = int_to_ptr.vmem [resolvable:$true] %s99
      %105 = dma.vmem_to_hbm [thread:$0]  %s100, 256, %s3, [#allocation4], 128, 128, 8
    $region21: #{tpu_custom_call.1} parent=1 // pred_fallthru
      _
    // Predicated region
    $region22: #{tpu_custom_call.1} parent=1 // pred_check
      _
    $region23: #{tpu_custom_call.1} parent=1 // pred_check_branch
      %107 = sbr.rel (0) target = $region25
    $region24: #{tpu_custom_call.1} parent=1 // pred_region
      %108 = dma.done [#allocation4], 256
    $region25: #{tpu_custom_call.1} parent=1 // pred_fallthru
      _
    %109 = vsyncpa [#allocation3], 1
    %110 = vsyncpa [#allocation4], 1

</llo_original>
